<compile_context>
chip_gen: v5e
topology: v5e:2x2
jax: 0.10.0
libtpu: 0.0.40
codegen_flags: <defaults>
</compile_context>

<pallas_src>
import functools

import jax
import jax.numpy as jnp
from jax.experimental import pallas as pl
from jax.experimental.pallas import tpu as pltpu

LSTM_OUT_DIM = 52            # self.lstm_out_dim in the PyTorch module
FEATURE_BOTTLENECK = 76      # `feature_bottleneck` global (undefined in source); chosen so F = 128
FENLEI_FEATURE = FEATURE_BOTTLENECK + LSTM_OUT_DIM   # 128 (lane-friendly)
NUM_CLASSES = 8
OUT_PAD = 128                # lane-dense padded class dimension
BATCH = 8
BN_EPS = 1e-5
NEG_BIG = -1e30              # "minus infinity" for padded class columns


def net_kernel(x_ref, w1_ref, b1_ref, w2_ref, b2_ref, out_ref):
    # x_ref: (bb, F) bf16 -- already cat([trn, lstm], -1), done in the wrapper.
    # Linear(F, F) with BN folded in (bf16 operands, f32 accumulation on MXU).
    h = jnp.dot(x_ref[...], w1_ref[...],
                preferred_element_type=jnp.float32) + b1_ref[...]

    # ReLU (f32 on the VPU).
    h = jnp.maximum(h, 0.0)

    # nn.Dropout(0.5): identity at inference.
    # TODO(synk): train-mode dropout (stochastic masking) not implemented.

    # Linear(F, num_classes), padded to 128 lanes. Pad columns of W2 are zero
    # and their bias is -1e30, so they vanish under log_softmax.
    logits = jnp.dot(h.astype(jnp.bfloat16), w2_ref[...],
                     preferred_element_type=jnp.float32) + b2_ref[...]

    # log_softmax over the last dim (f32). Padded columns contribute exp()==0.
    m = jnp.max(logits, axis=-1, keepdims=True)
    z = logits - m
    lse = jnp.log(jnp.sum(jnp.exp(z), axis=-1, keepdims=True))
    out_ref[...] = z - lse


def _round_up(x, m):
    return ((x + m - 1) // m) * m


@functools.partial(jax.jit, static_argnames=("block_b",))
def net_forward(trn_feat, lstm_feat, params, *, block_b=512):
    """trn_feat: (B, FEATURE_BOTTLENECK), lstm_feat: (B, LSTM_OUT_DIM)
    -> (B, NUM_CLASSES) log-probabilities."""
    w1, b1, gamma, beta, run_mean, run_var, w2, b2 = params
    F = FENLEI_FEATURE
    B = trn_feat.shape[0]

    # ---- wrapper-side parameter prep (plain JAX glue, negligible cost) ----
    # Fold BatchNorm1d running stats into W1/b1:  y = (xW1+b1)*s + t
    #   == x(W1*s) + (b1*s + t),  s = gamma/sqrt(var+eps), t = beta - mean*s
    inv_std = 1.0 / jnp.sqrt(run_var + BN_EPS)
    s = gamma * inv_std
    t = beta - run_mean * s
    w1_f = (w1 * s[None, :]).astype(jnp.bfloat16)          # (F, F) bf16
    b1_f = (b1 * s + t).reshape(1, F).astype(jnp.float32)  # (1, F) f32

    # Pad W2/b2 to a lane-dense 128-wide output. Pad bias = -1e30 -> exp()==0.
    w2_p = jnp.zeros((F, OUT_PAD), jnp.float32).at[:, :NUM_CLASSES].set(w2)
    w2_p = w2_p.astype(jnp.bfloat16)                        # (F, 128) bf16
    b2_p = jnp.full((1, OUT_PAD), NEG_BIG, jnp.float32)
    b2_p = b2_p.at[0, :NUM_CLASSES].set(b2)                 # (1, 128) f32

    # Concatenate the two feature vectors in the wrapper (no in-kernel
    # cross-lane concat), cast to bf16, and pad the batch to the block size.
    x = jnp.concatenate([trn_feat, lstm_feat], axis=-1)     # (B, F)
    bb = min(block_b, _round_up(B, 8))
    Bp = _round_up(B, bb)
    if Bp != B:
        x = jnp.pad(x, ((0, Bp - B), (0, 0)))
    x = x.astype(jnp.bfloat16)

    grid = (Bp // bb,)
    out = pl.pallas_call(
        net_kernel,
        out_shape=jax.ShapeDtypeStruct((Bp, OUT_PAD), jnp.float32),
        grid=grid,
        in_specs=[
            pl.BlockSpec((bb, F), lambda i: (i, 0)),        # x
            pl.BlockSpec((F, F), lambda i: (0, 0)),         # W1 (BN-folded)
            pl.BlockSpec((1, F), lambda i: (0, 0)),         # b1 (BN-folded)
            pl.BlockSpec((F, OUT_PAD), lambda i: (0, 0)),   # W2 (padded)
            pl.BlockSpec((1, OUT_PAD), lambda i: (0, 0)),   # b2 (padded)
        ],
        out_specs=pl.BlockSpec((bb, OUT_PAD), lambda i: (i, 0)),
        compiler_params=pltpu.CompilerParams(
            dimension_semantics=("parallel",)),              # v7x megacore-ready
    )(x, w1_f, b1_f, w2_p, b2_p)

    return out[:B, :NUM_CLASSES]


def reference_forward(trn_feat, lstm_feat, params):
    """Pure-JAX reference (f32) of the PyTorch classifier head (eval mode)."""
    w1, b1, gamma, beta, run_mean, run_var, w2, b2 = params
    x = jnp.concatenate([trn_feat, lstm_feat], axis=-1)
    h = x @ w1 + b1
    inv_std = 1.0 / jnp.sqrt(run_var + BN_EPS)
    h = (h - run_mean) * (gamma * inv_std) + beta
    h = jnp.maximum(h, 0.0)
    logits = h @ w2 + b2
    return jax.nn.log_softmax(logits, axis=-1)


def init_params(key):
    ks = jax.random.split(key, 8)
    w1 = jax.random.normal(ks[0], (FENLEI_FEATURE, FENLEI_FEATURE), jnp.float32) * 0.05
    b1 = jax.random.normal(ks[1], (FENLEI_FEATURE,), jnp.float32) * 0.01
    gamma = 1.0 + 0.1 * jax.random.normal(ks[2], (FENLEI_FEATURE,), jnp.float32)
    beta = 0.1 * jax.random.normal(ks[3], (FENLEI_FEATURE,), jnp.float32)
    run_mean = 0.1 * jax.random.normal(ks[4], (FENLEI_FEATURE,), jnp.float32)
    run_var = 1.0 + 0.1 * jnp.abs(jax.random.normal(ks[5], (FENLEI_FEATURE,), jnp.float32))
    w2 = jax.random.normal(ks[6], (FENLEI_FEATURE, NUM_CLASSES), jnp.float32) * 0.05
    b2 = jax.random.normal(ks[7], (NUM_CLASSES,), jnp.float32) * 0.01
    return (w1, b1, gamma, beta, run_mean, run_var, w2, b2)


if __name__ == "__main__":
    key = jax.random.PRNGKey(0)
    k_p, k_trn, k_lstm = jax.random.split(key, 3)

    params = init_params(k_p)
    # Stand-in inputs: the feature vectors that myTRN.Net / CNN_LSTM.ConvLSTM
    # would have produced (their definitions are not available).
    trn_feat = jax.random.normal(k_trn, (BATCH, FEATURE_BOTTLENECK), jnp.float32)
    lstm_feat = jax.random.normal(k_lstm, (BATCH, LSTM_OUT_DIM), jnp.float32)

    out = net_forward(trn_feat, lstm_feat, params)
    out = jax.block_until_ready(out)

    assert out.shape == (BATCH, NUM_CLASSES)
    # log_softmax rows must sum (in prob space) to ~1
    assert bool(jnp.all(jnp.abs(jnp.sum(jnp.exp(out), axis=-1) - 1.0) < 1e-3))
    # Compare against pure-JAX f32 reference (bf16 matmul tolerance).
    ref = reference_forward(trn_feat, lstm_feat, params)
    assert bool(jnp.max(jnp.abs(out - ref)) < 5e-2)
    print("KERNEL_OK")
</pallas_src>

<mosaic_0001>
module attributes {stable_mosaic.version = 11 : i64} {
  func.func @net_kernel(%arg0: i32, %arg1: memref<8x128xbf16, #tpu.memory_space<vmem>>, %arg2: memref<128x128xbf16, #tpu.memory_space<vmem>>, %arg3: memref<1x128xf32, #tpu.memory_space<vmem>>, %arg4: memref<128x128xbf16, #tpu.memory_space<vmem>>, %arg5: memref<1x128xf32, #tpu.memory_space<vmem>>, %arg6: memref<8x128xf32, #tpu.memory_space<vmem>>) attributes {dimension_semantics = [#tpu.dimension_semantics<parallel>], iteration_bounds = array<i64: 1>, scalar_prefetch = 0 : i64, scratch_operands = 0 : i64, tpu.core_type = #tpu.core_type<tc>, window_params = [{transform_indices = @transform_0, window_bounds = array<i64: 8, 128>}, {pipeline_mode = #tpu.pipeline_mode<synchronous>, transform_indices = @transform_1, window_bounds = array<i64: 128, 128>}, {pipeline_mode = #tpu.pipeline_mode<synchronous>, transform_indices = @transform_2, window_bounds = array<i64: 1, 128>}, {pipeline_mode = #tpu.pipeline_mode<synchronous>, transform_indices = @transform_3, window_bounds = array<i64: 128, 128>}, {pipeline_mode = #tpu.pipeline_mode<synchronous>, transform_indices = @transform_4, window_bounds = array<i64: 1, 128>}, {transform_indices = @transform_5, window_bounds = array<i64: 8, 128>}]} {
    %c0 = arith.constant 0 : index
    %c0_0 = arith.constant 0 : index
    %0 = vector.load %arg1[%c0, %c0_0] : memref<8x128xbf16, #tpu.memory_space<vmem>>, vector<8x128xbf16>
    %c0_1 = arith.constant 0 : index
    %c0_2 = arith.constant 0 : index
    %1 = vector.load %arg2[%c0_1, %c0_2] : memref<128x128xbf16, #tpu.memory_space<vmem>>, vector<128x128xbf16>
    %cst = arith.constant dense<0.000000e+00> : vector<8x128xf32>
    %2 = tpu.matmul %0, %1, %cst {dimension_numbers = #tpu.dot_dimension_numbers<[1], [0], [0], [1], [0, 0, 1, 1], [], []>} : vector<8x128xbf16>, vector<128x128xbf16>, vector<8x128xf32> -> vector<8x128xf32>
    %c0_3 = arith.constant 0 : index
    %c0_4 = arith.constant 0 : index
    %3 = vector.load %arg3[%c0_3, %c0_4] : memref<1x128xf32, #tpu.memory_space<vmem>>, vector<1x128xf32>
    %4 = vector.broadcast %3 : vector<1x128xf32> to vector<8x128xf32>
    %5 = arith.addf %2, %4 : vector<8x128xf32>
    %cst_5 = arith.constant 0.000000e+00 : f32
    %6 = vector.broadcast %cst_5 : f32 to vector<8x128xf32>
    %7 = arith.maximumf %5, %6 : vector<8x128xf32>
    %8 = arith.truncf %7 : vector<8x128xf32> to vector<8x128xbf16>
    %c0_6 = arith.constant 0 : index
    %c0_7 = arith.constant 0 : index
    %9 = vector.load %arg4[%c0_6, %c0_7] : memref<128x128xbf16, #tpu.memory_space<vmem>>, vector<128x128xbf16>
    %cst_8 = arith.constant dense<0.000000e+00> : vector<8x128xf32>
    %10 = tpu.matmul %8, %9, %cst_8 {dimension_numbers = #tpu.dot_dimension_numbers<[1], [0], [0], [1], [0, 0, 1, 1], [], []>} : vector<8x128xbf16>, vector<128x128xbf16>, vector<8x128xf32> -> vector<8x128xf32>
    %c0_9 = arith.constant 0 : index
    %c0_10 = arith.constant 0 : index
    %11 = vector.load %arg5[%c0_9, %c0_10] : memref<1x128xf32, #tpu.memory_space<vmem>>, vector<1x128xf32>
    %12 = vector.broadcast %11 : vector<1x128xf32> to vector<8x128xf32>
    %13 = arith.addf %10, %12 : vector<8x128xf32>
    %cst_11 = arith.constant dense<0xFF800000> : vector<8xf32>
    %14 = vector.multi_reduction <maximumf>, %13, %cst_11 [1] : vector<8x128xf32> to vector<8xf32>
    %15 = vector.shape_cast %14 : vector<8xf32> to vector<8x1xf32>
    %16 = vector.broadcast %15 : vector<8x1xf32> to vector<8x128xf32>
    %17 = arith.subf %13, %16 : vector<8x128xf32>
    %18 = math.exp %17 : vector<8x128xf32>
    %cst_12 = arith.constant dense<0.000000e+00> : vector<8xf32>
    %19 = vector.multi_reduction <add>, %18, %cst_12 [1] : vector<8x128xf32> to vector<8xf32>
    %20 = vector.shape_cast %19 : vector<8xf32> to vector<8x1xf32>
    %21 = math.log %20 : vector<8x1xf32>
    %22 = vector.broadcast %21 : vector<8x1xf32> to vector<8x128xf32>
    %23 = arith.subf %17, %22 : vector<8x128xf32>
    %c0_13 = arith.constant 0 : index
    %c0_14 = arith.constant 0 : index
    %24 = vector.load %arg6[%c0_13, %c0_14] : memref<8x128xf32, #tpu.memory_space<vmem>>, vector<8x128xf32>
    tpu.vector_store %arg6[%c0_13, %c0_14], %23 {strides = array<i32>} : memref<8x128xf32, #tpu.memory_space<vmem>>, vector<8x128xf32>,
    return
  }
  func.func @transform_0(%arg0: i32) -> (i32, i32) {
    %c0_i32 = arith.constant 0 : i32
    %c0_i32_0 = arith.constant 0 : i32
    return %arg0, %c0_i32 : i32, i32
  }
  func.func @transform_1(%arg0: i32) -> (i32, i32) {
    %c0_i32 = arith.constant 0 : i32
    %c0_i32_0 = arith.constant 0 : i32
    %c0_i32_1 = arith.constant 0 : i32
    return %c0_i32, %c0_i32_0 : i32, i32
  }
  func.func @transform_2(%arg0: i32) -> (i32, i32) {
    %c0_i32 = arith.constant 0 : i32
    %c0_i32_0 = arith.constant 0 : i32
    %c0_i32_1 = arith.constant 0 : i32
    return %c0_i32, %c0_i32_0 : i32, i32
  }
  func.func @transform_3(%arg0: i32) -> (i32, i32) {
    %c0_i32 = arith.constant 0 : i32
    %c0_i32_0 = arith.constant 0 : i32
    %c0_i32_1 = arith.constant 0 : i32
    return %c0_i32, %c0_i32_0 : i32, i32
  }
  func.func @transform_4(%arg0: i32) -> (i32, i32) {
    %c0_i32 = arith.constant 0 : i32
    %c0_i32_0 = arith.constant 0 : i32
    %c0_i32_1 = arith.constant 0 : i32
    return %c0_i32, %c0_i32_0 : i32, i32
  }
  func.func @transform_5(%arg0: i32) -> (i32, i32) {
    %c0_i32 = arith.constant 0 : i32
    %c0_i32_0 = arith.constant 0 : i32
    return %arg0, %c0_i32 : i32, i32
  }
}

</mosaic_0001>

<llo_original>
// kernel: net_forward.1
$region0: #{net_forward.1}
  #allocation0 [shape = 'u32[]', space=smem, size = 0x4, offset = 0x4, fixed_abs, tag = 'smem constant byte address 0x4 - core index']
  #allocation1 [shape = 'u32[72,128]{1,0:T(1,128)}', space=vmem, size = 0x9000, scoped, tag = 'internal scratch']
  %s0 = inlined_call_operand.vmem [shape: bf16[8,128], index: 0, kind: input, shape index: {}]
  %s1 = inlined_call_operand.vmem [shape: bf16[128,128], index: 1, kind: input, shape index: {}]
  %s2 = inlined_call_operand.vmem [shape: f32[1,128], index: 2, kind: input, shape index: {}]
  %s3 = inlined_call_operand.vmem [shape: bf16[128,128], index: 3, kind: input, shape index: {}]
  %s4 = inlined_call_operand.vmem [shape: f32[1,128], index: 4, kind: input, shape index: {}]
  %s5 = inlined_call_operand.hbm [shape: f32[8,128], index: 5, kind: output, shape index: {}]
  %s6 = sld [smem:[#allocation0]]
  $region30: #{net_forward.1} parent=0
    _
  %s8 = ssub.s32 1, %s6
  %s9 = scalar_select 0, %s8, %s6
  $region1: #{net_forward.1} parent=0
    #allocation2 [shape = 'u8[4096]{0}', space=vmem, size = 0x1000, scoped, tag = 'output window, operand 0, single buffered']
    #allocation3 [shape = 's32[1]{0}', space=sflag, size = 0x4, scoped, tag = 'scoped memory for net_forward.1']
    %10 = vsyncpa [#allocation3], 0
    // Predicated region
    $region2: #{net_forward.1} parent=1 // pred_check
      _
    $region3: #{net_forward.1} parent=1 // pred_check_branch
      %12 = sbr.rel (0) target = $region5
    $region4: #{net_forward.1} parent=1 // pred_region
      _
    $region5: #{net_forward.1} parent=1 // pred_fallthru
      _
    // Predicated region
    $region6: #{net_forward.1} parent=1 // pred_check
      _
    $region7: #{net_forward.1} parent=1 // pred_check_branch
      %14 = sbr.rel (0) target = $region9
    $region8: #{net_forward.1} parent=1 // pred_region
      _
    $region9: #{net_forward.1} parent=1 // pred_fallthru
      _
    // Predicated region
    $region10: #{net_forward.1} parent=1 // pred_check
      _
    $region11: #{net_forward.1} parent=1 // pred_check_branch
      %16 = sbr.rel (0) target = $region13
    $region12: #{net_forward.1} parent=1 // pred_region
      _
    $region13: #{net_forward.1} parent=1 // pred_fallthru
      _
    // Predicated region
    $region14: #{net_forward.1} parent=1 // pred_check
      _
    $region15: #{net_forward.1} parent=1 // pred_check_branch
      %18 = sbr.rel (0) target = $region17
    $region16: #{net_forward.1} parent=1 // pred_region
      _
    $region17: #{net_forward.1} parent=1 // pred_fallthru
      _
    // Predicated region
    $region18: #{net_forward.1} parent=1 // pred_check
      _
    $region19: #{net_forward.1} parent=1 // pred_check_branch
      %20 = sbr.rel (0) target = $region21
    $region20: #{net_forward.1} parent=1 // pred_region
      _
    $region21: #{net_forward.1} parent=1 // pred_fallthru
      _
    %v21 = vld [vmem:[%s0] sm:$0xf]
    %v22 = vld [vmem:[%s1] sm:$0xf]
    %v23 = vld [vmem:[%s1 + $0x4] sm:$0xf]
    %v24 = vld [vmem:[%s1 + $0x8] sm:$0xf]
    %v25 = vld [vmem:[%s1 + $0xc] sm:$0xf]
    %v26 = vld [vmem:[%s1 + $0x10] sm:$0xf]
    %v27 = vld [vmem:[%s1 + $0x14] sm:$0xf]
    %v28 = vld [vmem:[%s1 + $0x18] sm:$0xf]
    %v29 = vld [vmem:[%s1 + $0x1c] sm:$0xf]
    %v30 = vld [vmem:[%s1 + $0x20] sm:$0xf]
    %v31 = vld [vmem:[%s1 + $0x24] sm:$0xf]
    %v32 = vld [vmem:[%s1 + $0x28] sm:$0xf]
    %v33 = vld [vmem:[%s1 + $0x2c] sm:$0xf]
    %v34 = vld [vmem:[%s1 + $0x30] sm:$0xf]
    %v35 = vld [vmem:[%s1 + $0x34] sm:$0xf]
    %v36 = vld [vmem:[%s1 + $0x38] sm:$0xf]
    %v37 = vld [vmem:[%s1 + $0x3c] sm:$0xf]
    %v38 = vld [vmem:[%s2] sm:$0x1]
    %v40 = vperm.slane %v38, 0
    %v58 = vunpack.c.l.b16 %v22
    %v59 = vunpack.c.l.b16 %v23
    %v60 = vunpack.c.l.b16 %v24
    %v61 = vunpack.c.l.b16 %v25
    %v62 = vunpack.c.l.b16 %v26
    %v63 = vunpack.c.l.b16 %v27
    %v64 = vunpack.c.l.b16 %v28
    %v65 = vunpack.c.l.b16 %v29
    %v66 = vunpack.c.l.b16 %v30
    %v67 = vunpack.c.l.b16 %v31
    %v68 = vunpack.c.l.b16 %v32
    %v69 = vunpack.c.l.b16 %v33
    %v70 = vunpack.c.l.b16 %v34
    %v71 = vunpack.c.l.b16 %v35
    %v72 = vunpack.c.l.b16 %v36
    %v73 = vunpack.c.l.b16 %v37
    %v74 = vpack.c.b16 %v59, %v58
    %v75 = vpack.c.b16 %v61, %v60
    %v76 = vpack.c.b16 %v63, %v62
    %v77 = vpack.c.b16 %v65, %v64
    %v78 = vpack.c.b16 %v67, %v66
    %v79 = vpack.c.b16 %v69, %v68
    %v80 = vpack.c.b16 %v71, %v70
    %v81 = vpack.c.b16 %v73, %v72
    %90 = vmatpush.bf16.msra.mxu0 %v81
    %91 = vmatpush.bf16.msra.mxu0 %v80
    %92 = vmatpush.bf16.msra.mxu0 %v79
    %93 = vmatpush.bf16.msra.mxu0 %v78
    %94 = vmatpush.bf16.msra.mxu0 %v77
    %95 = vmatpush.bf16.msra.mxu0 %v76
    %96 = vmatpush.bf16.msra.mxu0 %v75
    %97 = vmatpush.bf16.msra.mxu0 %v74
    %98 = vmatmul.bf16.gmra.mxu0 %v21
    %v99 = vpop.f32.mrf.mxu0
    %v100 = vadd.f32 %v40, %v99
    %v101 = vpop.f32.mrf.mxu0
    %102 = vdwg.mxu0
    %v103 = vmax.f32 %v100, 0.0
    %v104 = vpack.c.bf16 %v103, %v103
    %v105 = vld [vmem:[%s3] sm:$0xf]
    %v106 = vld [vmem:[%s3 + $0x4] sm:$0xf]
    %v107 = vld [vmem:[%s3 + $0x8] sm:$0xf]
    %v108 = vld [vmem:[%s3 + $0xc] sm:$0xf]
    %v109 = vld [vmem:[%s3 + $0x10] sm:$0xf]
    %v110 = vld [vmem:[%s3 + $0x14] sm:$0xf]
    %v111 = vld [vmem:[%s3 + $0x18] sm:$0xf]
    %v112 = vld [vmem:[%s3 + $0x1c] sm:$0xf]
    %v113 = vld [vmem:[%s3 + $0x20] sm:$0xf]
    %v114 = vld [vmem:[%s3 + $0x24] sm:$0xf]
    %v115 = vld [vmem:[%s3 + $0x28] sm:$0xf]
    %v116 = vld [vmem:[%s3 + $0x2c] sm:$0xf]
    %v117 = vld [vmem:[%s3 + $0x30] sm:$0xf]
    %v118 = vld [vmem:[%s3 + $0x34] sm:$0xf]
    %v119 = vld [vmem:[%s3 + $0x38] sm:$0xf]
    %v120 = vld [vmem:[%s3 + $0x3c] sm:$0xf]
    %v121 = vld [vmem:[%s4] sm:$0x1]
    %v123 = vperm.slane %v121, 0
    %v141 = vunpack.c.l.b16 %v105
    %v142 = vunpack.c.l.b16 %v106
    %v143 = vunpack.c.l.b16 %v107
    %v144 = vunpack.c.l.b16 %v108
    %v145 = vunpack.c.l.b16 %v109
    %v146 = vunpack.c.l.b16 %v110
    %v147 = vunpack.c.l.b16 %v111
    %v148 = vunpack.c.l.b16 %v112
    %v149 = vunpack.c.l.b16 %v113
    %v150 = vunpack.c.l.b16 %v114
    %v151 = vunpack.c.l.b16 %v115
    %v152 = vunpack.c.l.b16 %v116
    %v153 = vunpack.c.l.b16 %v117
    %v154 = vunpack.c.l.b16 %v118
    %v155 = vunpack.c.l.b16 %v119
    %v156 = vunpack.c.l.b16 %v120
    %v157 = vpack.c.b16 %v142, %v141
    %v158 = vpack.c.b16 %v144, %v143
    %v159 = vpack.c.b16 %v146, %v145
    %v160 = vpack.c.b16 %v148, %v147
    %v161 = vpack.c.b16 %v150, %v149
    %v162 = vpack.c.b16 %v152, %v151
    %v163 = vpack.c.b16 %v154, %v153
    %v164 = vpack.c.b16 %v156, %v155
    %173 = vmatpush.bf16.msra.mxu0 %v164
    %174 = vmatpush.bf16.msra.mxu0 %v163
    %175 = vmatpush.bf16.msra.mxu0 %v162
    %176 = vmatpush.bf16.msra.mxu0 %v161
    %177 = vmatpush.bf16.msra.mxu0 %v160
    %178 = vmatpush.bf16.msra.mxu0 %v159
    %179 = vmatpush.bf16.msra.mxu0 %v158
    %180 = vmatpush.bf16.msra.mxu0 %v157
    %181 = vmatmul.bf16.gmra.mxu0 %v104
    %v182 = vpop.f32.mrf.mxu0
    %v183 = vadd.f32 %v123, %v182
    %v184 = vpop.f32.mrf.mxu0
    %185 = vdwg.mxu0
    %186 = vmax.xlane.f32.xlu0 %v183
    %v187 = vpop.xlane.xlu0 %186
    %v188 = vsub.f32 %v183, %v187
    %v189 = vmul.f32 %v188, 1.442695
    %v190 = vpow.pop %v189
    %191 = vadd.xlane.f32.xlu0 %v190
    %v192 = vpop.xlane.xlu0 %191
    %v193 = vlog2.pop %v192
    %v194 = vmul.f32 %v193, 0.6931472
    %v195 = vsub.f32 %v188, %v194
    %196 = vst [vmem:[#allocation2] sm:$0xff] %v195
    // Predicated region
    $region22: #{net_forward.1} parent=1 // pred_check
      _
    $region23: #{net_forward.1} parent=1 // pred_check_branch
      %198 = sbr.rel (0) target = $region25
    $region24: #{net_forward.1} parent=1 // pred_region
      %200 = vsyncadd [#allocation3], 0
      %s202 = sshll.u32 [#allocation2], 4
      %s203 = int_to_ptr.vmem [resolvable:$true] %s202
      %s204 = sshll.u32 %s5, 4
      %s205 = int_to_ptr.hbm [resolvable:$true] %s204
      %207 = dma.vmem_to_hbm [thread:$0]  %s203, 128, %s205, [#allocation3]
    $region25: #{net_forward.1} parent=1 // pred_fallthru
      _
    // Predicated region
    $region26: #{net_forward.1} parent=1 // pred_check
      _
    $region27: #{net_forward.1} parent=1 // pred_check_branch
      %209 = sbr.rel (0) target = $region29
    $region28: #{net_forward.1} parent=1 // pred_region
      %211 = dma.done [#allocation3], 128
    $region29: #{net_forward.1} parent=1 // pred_fallthru
      _
    %212 = vsyncpa [#allocation3], 1

</llo_original>
